<compile_context>
chip_gen: v5e
topology: v5e:2x2
jax: 0.10.0
libtpu: 0.0.40
codegen_flags: <defaults>
</compile_context>

<pallas_src>
import jax
import jax.numpy as jnp
from jax.experimental import pallas as pl
from jax.experimental.pallas import tpu as pltpu


# ---------------------------------------------------------------------------
# Kernel
# ---------------------------------------------------------------------------
def _make_dense_block_kernel(c0, growth, c_mid, t, taps, num_layers):
    """Fused dense-block kernel for static shapes.

    Ref order: x, bn_vec_slab, w1_slab, w2_slab, out.
    The output block doubles as the running concat buffer.
    """

    def kernel(x_ref, vec_ref, w1_ref, w2_ref, o_ref):
        # Seed the running concat buffer (== the output block) with init_features.
        o_ref[0:c0, :] = x_ref[...]

        # Lane-index map for the conv halo masks (hoisted out of all loops).
        lane = jax.lax.broadcasted_iota(jnp.int32, (c_mid, t), 1)

        for i in range(num_layers):
            c_in = c0 + i * growth
            k = taps[i]
            pad = k // 2

            s1 = vec_ref[i, 0, 0:c_in, :]      # (c_in, 1)  folded BN1 scale
            t1 = vec_ref[i, 1, 0:c_in, :]      # (c_in, 1)  folded BN1 shift
            t2 = vec_ref[i, 2, 0:c_mid, :]     # (c_mid, 1) folded BN2 shift (conv1 bias)

            # norm1 (folded BN, running stats) + SiLU on the concat prefix.
            a = o_ref[0:c_in, :]
            a = a * s1 + t1
            a = a * jax.nn.sigmoid(a)                          # SiLU

            # conv1 (1x1) with BN2's scale folded into the weight; bias = BN2 shift.
            h = jnp.dot(w1_ref[i, :, 0:c_in], a.astype(jnp.bfloat16),
                        preferred_element_type=jnp.float32) + t2
            h = h * jax.nn.sigmoid(h)                          # SiLU

            # conv2 (kernel k, zero padding p): stack the k lane-shifted views of
            # h via XLU rolls + halo masks, then a single MXU matmul against the
            # pre-stacked (growth, k*c_mid) weight.
            zs = []
            for dk in range(k):
                d = dk - pad                    # this tap reads h[:, t + d]
                if d == 0:
                    hs = h
                else:
                    hs = pltpu.roll(h, shift=(-d) % t, axis=1)
                    if d > 0:
                        hs = jnp.where(lane < (t - d), hs, 0.0)
                    else:
                        hs = jnp.where(lane >= (-d), hs, 0.0)
                zs.append(hs.astype(jnp.bfloat16))
            z = jnp.concatenate(zs, axis=0)                     # (k*c_mid, t) bf16
            new = jnp.dot(w2_ref[i, :, 0:k * c_mid], z,
                          preferred_element_type=jnp.float32)   # (growth, t) f32

            # Append new_features (drop_rate=0 / eval -> dropout is identity).
            o_ref[c_in:c_in + growth, :] = new

    return kernel


# ---------------------------------------------------------------------------
# Parameter folding / packing
# ---------------------------------------------------------------------------
def _fold_bn(gamma, beta, mean, var, eps):
    scale = gamma / jnp.sqrt(var + eps)
    shift = beta - mean * scale
    return scale, shift


def _fold_layer(lp, eps):
    """BN1 -> (s1, t1); BN2 folded into the 1x1 conv -> (w1f bf16, t2); w2 bf16."""
    s1, t1 = _fold_bn(lp["bn1_g"], lp["bn1_b"], lp["bn1_m"], lp["bn1_v"], eps)
    s2, t2 = _fold_bn(lp["bn2_g"], lp["bn2_b"], lp["bn2_m"], lp["bn2_v"], eps)
    w1f = (s2[:, None] * lp["w1"][:, :, 0]).astype(jnp.bfloat16)   # (c_mid, c_in)
    w2b = lp["w2"].astype(jnp.bfloat16)                            # (growth, c_mid, k)
    return s1, t1, w1f, t2, w2b


def _pad_axis(a, target, axis):
    widths = [(0, 0)] * a.ndim
    widths[axis] = (0, target - a.shape[axis])
    return jnp.pad(a, widths)


# ---------------------------------------------------------------------------
# Wrapper
# ---------------------------------------------------------------------------
def dense_block_pallas(x, layer_params, eps=1e-5):
    """x: (B, C0, T) float32; layer_params: list of dicts with raw BN/conv params."""
    B, C0, T = x.shape
    L = len(layer_params)
    growth = layer_params[0]["w2"].shape[0]
    c_mid = layer_params[0]["w1"].shape[0]
    taps = tuple(int(lp["w2"].shape[-1]) for lp in layer_params)
    k_max = max(taps)
    c_max = C0 + (L - 1) * growth          # widest per-layer input channel count
    c_vec = max(c_max, c_mid)
    C_total = C0 + L * growth

    # Requirements of this kernel (see TODOs at the top of the file).
    assert x.dtype == jnp.float32, "o_ref doubles as the f32 accumulator"
    assert C0 % 8 == 0 and growth % 8 == 0 and c_mid % 8 == 0, "sublane alignment"
    assert T % 128 == 0, "lane-dense output requires T % 128 == 0"
    assert k_max < T

    # Pack the per-layer parameters into 3 consolidated, zero-padded slabs.
    vec_rows, w1_rows, w2_rows = [], [], []
    for lp in layer_params:
        s1, t1, w1f, t2, w2b = _fold_layer(lp, eps)
        k = w2b.shape[-1]
        vec_rows.append(jnp.stack([_pad_axis(s1, c_vec, 0),
                                   _pad_axis(t1, c_vec, 0),
                                   _pad_axis(t2, c_vec, 0)], axis=0)[:, :, None])
        w1_rows.append(_pad_axis(w1f, c_max, 1))
        w2s = jnp.transpose(w2b, (0, 2, 1)).reshape(growth, k * c_mid)  # tap-major
        w2_rows.append(_pad_axis(w2s, k_max * c_mid, 1))
    vec_slab = jnp.stack(vec_rows, axis=0)        # (L, 3, c_vec, 1) f32
    w1_slab = jnp.stack(w1_rows, axis=0)          # (L, c_mid, c_max) bf16
    w2_slab = jnp.stack(w2_rows, axis=0)          # (L, growth, k_max*c_mid) bf16

    kernel = _make_dense_block_kernel(C0, growth, c_mid, T, taps, L)

    return pl.pallas_call(
        kernel,
        out_shape=jax.ShapeDtypeStruct((B, C_total, T), x.dtype),
        grid_spec=pltpu.PrefetchScalarGridSpec(
            num_scalar_prefetch=0,
            grid=(B,),
            in_specs=[
                pl.BlockSpec((None, C0, T), lambda b: (b, 0, 0)),
                # Constant index_map -> parameter slabs are DMA'd once and reused.
                pl.BlockSpec((L, 3, c_vec, 1), lambda b: (0, 0, 0, 0)),
                pl.BlockSpec((L, c_mid, c_max), lambda b: (0, 0, 0)),
                pl.BlockSpec((L, growth, k_max * c_mid), lambda b: (0, 0, 0)),
            ],
            out_specs=pl.BlockSpec((None, C_total, T), lambda b: (b, 0, 0)),
        ),
        compiler_params=pltpu.CompilerParams(
            dimension_semantics=("parallel",),     # batch axis across TensorCores
            vmem_limit_bytes=32 * 1024 * 1024,
        ),
    )(x, vec_slab, w1_slab, w2_slab)


# ---------------------------------------------------------------------------
# Pure-JAX references
# ---------------------------------------------------------------------------
def _bn_silu_ref(x, gamma, beta, mean, var, eps):
    y = (x - mean[None, :, None]) / jnp.sqrt(var[None, :, None] + eps)
    y = y * gamma[None, :, None] + beta[None, :, None]
    return y * jax.nn.sigmoid(y)


def dense_block_ref(x, layer_params, eps=1e-5):
    """Full-f32 mirror of the PyTorch module in eval mode."""
    feats = x
    for lp in layer_params:
        a = _bn_silu_ref(feats, lp["bn1_g"], lp["bn1_b"], lp["bn1_m"], lp["bn1_v"], eps)
        h = jnp.einsum("oc,bct->bot", lp["w1"][:, :, 0], a,
                       precision=jax.lax.Precision.HIGHEST)
        z = _bn_silu_ref(h, lp["bn2_g"], lp["bn2_b"], lp["bn2_m"], lp["bn2_v"], eps)
        k = lp["w2"].shape[-1]
        pad = k // 2
        new = jax.lax.conv_general_dilated(
            z, lp["w2"], window_strides=(1,), padding=[(pad, pad)],
            dimension_numbers=("NCH", "OIH", "NCH"),
            precision=jax.lax.Precision.HIGHEST)
        feats = jnp.concatenate([feats, new], axis=1)
    return feats


def dense_block_bf16_ref(x, layer_params, eps=1e-5):
    """Mirror of the KERNEL's numerics (folded BN, bf16 matmul operands, f32
    accumulation) built with lax.conv / einsum -- used for a tight structural check."""
    feats = x
    for lp in layer_params:
        s1, t1, w1f, t2, w2b = _fold_layer(lp, eps)
        a = feats * s1[None, :, None] + t1[None, :, None]
        a = a * jax.nn.sigmoid(a)
        h = jnp.einsum("oc,bct->bot", w1f, a.astype(jnp.bfloat16),
                       preferred_element_type=jnp.float32)
        h = h + t2[None, :, None]
        z = h * jax.nn.sigmoid(h)
        k = lp["w2"].shape[-1]
        pad = k // 2
        new = jax.lax.conv_general_dilated(
            z.astype(jnp.bfloat16), w2b, window_strides=(1,),
            padding=[(pad, pad)], dimension_numbers=("NCH", "OIH", "NCH"),
            preferred_element_type=jnp.float32)
        feats = jnp.concatenate([feats, new], axis=1)
    return feats


# ---------------------------------------------------------------------------
# Demo / self-test
# ---------------------------------------------------------------------------
def _make_layer_params(key, c_in, c_mid, growth, k):
    ks = jax.random.split(key, 10)
    uni = lambda kk, shape: jax.random.uniform(kk, shape, jnp.float32, 0.5, 1.5)
    nrm = lambda kk, shape, s: s * jax.random.normal(kk, shape, jnp.float32)
    return {
        "bn1_g": uni(ks[0], (c_in,)),
        "bn1_b": nrm(ks[1], (c_in,), 0.1),
        "bn1_m": nrm(ks[2], (c_in,), 0.2),
        "bn1_v": uni(ks[3], (c_in,)),
        "w1":    nrm(ks[4], (c_mid, c_in, 1), 1.0) / jnp.sqrt(c_in),
        "bn2_g": uni(ks[5], (c_mid,)),
        "bn2_b": nrm(ks[6], (c_mid,), 0.1),
        "bn2_m": nrm(ks[7], (c_mid,), 0.2),
        "bn2_v": uni(ks[8], (c_mid,)),
        "w2":    nrm(ks[9], (growth, c_mid, k), 1.0) / jnp.sqrt(c_mid * k),
    }


if __name__ == "__main__":
    # Shapes consistent with the module:
    #   num_input_features=16, growth_rate=8, bn_size=2, num_layers=3,
    #   kernel_size=3, kernel_size_increment=2 -> layer kernels 3, 5, 7.
    B, C0, T = 2, 16, 128                 # T = 128 keeps stores lane-dense
    num_layers, bn_size, growth = 3, 2, 8
    kernel_size, kernel_size_increment = 3, 2
    c_mid = bn_size * growth

    key = jax.random.PRNGKey(0)
    kx, kp = jax.random.split(key)
    x = jax.random.normal(kx, (B, C0, T), jnp.float32)

    layer_params = []
    lkeys = jax.random.split(kp, num_layers)
    for i in range(num_layers):
        k = kernel_size + i * kernel_size_increment
        if k % 2 == 0:
            k += 1
        if k > 100:
            k = 99
        layer_params.append(_make_layer_params(lkeys[i], C0 + i * growth, c_mid, growth, k))

    out = jax.jit(dense_block_pallas)(x, layer_params)
    out = jax.block_until_ready(out)

    assert out.shape == (B, C0 + num_layers * growth, T)

    # Tight structural check: a pure-JAX mirror of the kernel's exact numerics
    # (same folded params, same bf16 matmul operands, f32 accumulation); only
    # accumulation order / transcendental impl may differ.
    ref_bf16 = dense_block_bf16_ref(x, layer_params)
    err_tight = float(jnp.max(jnp.abs(out - ref_bf16)))
    assert jnp.allclose(out, ref_bf16, atol=1e-3, rtol=1e-3), (
        f"structural mismatch vs bf16-numerics reference, max abs err = {err_tight}")

    # Loose check vs the full-f32 PyTorch-faithful reference: bounds the bf16
    # matmul-operand error and guards the BN folding done in the wrapper.
    ref_f32 = dense_block_ref(x, layer_params)
    err_f32 = float(jnp.max(jnp.abs(out - ref_f32)))
    assert jnp.allclose(out, ref_f32, atol=1e-1, rtol=1e-1), (
        f"mismatch vs f32 reference, max abs err = {err_f32}")

    print("KERNEL_OK")
</pallas_src>

<mosaic_0001>
module attributes {stable_mosaic.version = 11 : i64} {
  func.func @kernel(%arg0: i32, %arg1: memref<1x16x128xf32, #tpu.memory_space<vmem>>, %arg2: memref<3x3x32x1xf32, #tpu.memory_space<vmem>>, %arg3: memref<3x16x32xbf16, #tpu.memory_space<vmem>>, %arg4: memref<3x8x112xbf16, #tpu.memory_space<vmem>>, %arg5: memref<1x40x128xf32, #tpu.memory_space<vmem>>) attributes {dimension_semantics = [#tpu.dimension_semantics<parallel>], iteration_bounds = array<i64: 2>, scalar_prefetch = 0 : i64, scratch_operands = 0 : i64, tpu.core_type = #tpu.core_type<tc>, window_params = [{transform_indices = @transform_0, window_bounds = array<i64: 1, 16, 128>}, {pipeline_mode = #tpu.pipeline_mode<synchronous>, transform_indices = @transform_1, window_bounds = array<i64: 3, 3, 32, 1>}, {pipeline_mode = #tpu.pipeline_mode<synchronous>, transform_indices = @transform_2, window_bounds = array<i64: 3, 16, 32>}, {pipeline_mode = #tpu.pipeline_mode<synchronous>, transform_indices = @transform_3, window_bounds = array<i64: 3, 8, 112>}, {transform_indices = @transform_4, window_bounds = array<i64: 1, 40, 128>}]} {
    %c0 = arith.constant 0 : index
    %c0_0 = arith.constant 0 : index
    %c0_1 = arith.constant 0 : index
    %0 = vector.load %arg1[%c0, %c0_0, %c0_1] : memref<1x16x128xf32, #tpu.memory_space<vmem>>, vector<1x16x128xf32>
    %1 = vector.shape_cast %0 : vector<1x16x128xf32> to vector<16x128xf32>
    %c0_2 = arith.constant 0 : index
    %c0_3 = arith.constant 0 : index
    %c0_4 = arith.constant 0 : index
    %2 = vector.load %arg5[%c0_2, %c0_3, %c0_4] : memref<1x40x128xf32, #tpu.memory_space<vmem>>, vector<1x16x128xf32>
    %3 = vector.shape_cast %2 : vector<1x16x128xf32> to vector<16x128xf32>
    %4 = vector.shape_cast %1 : vector<16x128xf32> to vector<1x16x128xf32>
    tpu.vector_store %arg5[%c0_2, %c0_3, %c0_4], %4 {strides = array<i32>} : memref<1x40x128xf32, #tpu.memory_space<vmem>>, vector<1x16x128xf32>,
    %5 = tpu.iota {dimensions = array<i32: 1>} : vector<16x128xi32>
    %c0_5 = arith.constant 0 : index
    %c0_6 = arith.constant 0 : index
    %c0_7 = arith.constant 0 : index
    %c0_8 = arith.constant 0 : index
    %6 = vector.load %arg2[%c0_5, %c0_6, %c0_7, %c0_8] : memref<3x3x32x1xf32, #tpu.memory_space<vmem>>, vector<1x1x16x1xf32>
    %7 = vector.shape_cast %6 : vector<1x1x16x1xf32> to vector<16x1xf32>
    %c0_9 = arith.constant 0 : index
    %c1 = arith.constant 1 : index
    %c0_10 = arith.constant 0 : index
    %c0_11 = arith.constant 0 : index
    %8 = vector.load %arg2[%c0_9, %c1, %c0_10, %c0_11] : memref<3x3x32x1xf32, #tpu.memory_space<vmem>>, vector<1x1x16x1xf32>
    %9 = vector.shape_cast %8 : vector<1x1x16x1xf32> to vector<16x1xf32>
    %c0_12 = arith.constant 0 : index
    %c2 = arith.constant 2 : index
    %c0_13 = arith.constant 0 : index
    %c0_14 = arith.constant 0 : index
    %10 = vector.load %arg2[%c0_12, %c2, %c0_13, %c0_14] : memref<3x3x32x1xf32, #tpu.memory_space<vmem>>, vector<1x1x16x1xf32>
    %11 = vector.shape_cast %10 : vector<1x1x16x1xf32> to vector<16x1xf32>
    %c0_15 = arith.constant 0 : index
    %c0_16 = arith.constant 0 : index
    %c0_17 = arith.constant 0 : index
    %12 = vector.load %arg5[%c0_15, %c0_16, %c0_17] : memref<1x40x128xf32, #tpu.memory_space<vmem>>, vector<1x16x128xf32>
    %13 = vector.shape_cast %12 : vector<1x16x128xf32> to vector<16x128xf32>
    %14 = vector.broadcast %7 : vector<16x1xf32> to vector<16x128xf32>
    %15 = arith.mulf %13, %14 : vector<16x128xf32>
    %16 = vector.broadcast %9 : vector<16x1xf32> to vector<16x128xf32>
    %17 = arith.addf %15, %16 : vector<16x128xf32>
    %18 = arith.negf %17 : vector<16x128xf32>
    %19 = math.exp %18 : vector<16x128xf32>
    %cst = arith.constant 1.000000e+00 : f32
    %20 = vector.broadcast %cst : f32 to vector<16x128xf32>
    %21 = arith.addf %20, %19 : vector<16x128xf32>
    %22 = arith.divf %20, %21 : vector<16x128xf32>
    %23 = arith.mulf %17, %22 : vector<16x128xf32>
    %c0_18 = arith.constant 0 : index
    %c0_19 = arith.constant 0 : index
    %c0_20 = arith.constant 0 : index
    %24 = vector.load %arg3[%c0_18, %c0_19, %c0_20] : memref<3x16x32xbf16, #tpu.memory_space<vmem>>, vector<1x16x16xbf16>
    %25 = vector.shape_cast %24 : vector<1x16x16xbf16> to vector<16x16xbf16>
    %26 = arith.truncf %23 : vector<16x128xf32> to vector<16x128xbf16>
    %cst_21 = arith.constant dense<0.000000e+00> : vector<16x128xf32>
    %27 = tpu.matmul %25, %26, %cst_21 {dimension_numbers = #tpu.dot_dimension_numbers<[1], [0], [0], [1], [0, 0, 1, 1], [], []>} : vector<16x16xbf16>, vector<16x128xbf16>, vector<16x128xf32> -> vector<16x128xf32>
    %28 = vector.broadcast %11 : vector<16x1xf32> to vector<16x128xf32>
    %29 = arith.addf %27, %28 : vector<16x128xf32>
    %30 = arith.negf %29 : vector<16x128xf32>
    %31 = math.exp %30 : vector<16x128xf32>
    %cst_22 = arith.constant 1.000000e+00 : f32
    %32 = vector.broadcast %cst_22 : f32 to vector<16x128xf32>
    %33 = arith.addf %32, %31 : vector<16x128xf32>
    %34 = arith.divf %32, %33 : vector<16x128xf32>
    %35 = arith.mulf %29, %34 : vector<16x128xf32>
    %c1_i32 = arith.constant 1 : i32
    %36 = tpu.dynamic_rotate %35 by %c1_i32 dim 1 : vector<16x128xf32>, i32 -> vector<16x128xf32>
    %c1_i32_23 = arith.constant 1 : i32
    %37 = vector.broadcast %c1_i32_23 : i32 to vector<16x128xi32>
    %38 = arith.cmpi sge, %5, %37 : vector<16x128xi32>
    %cst_24 = arith.constant 0.000000e+00 : f32
    %39 = vector.broadcast %cst_24 : f32 to vector<16x128xf32>
    %40 = arith.select %38, %36, %39 : vector<16x128xi1>, vector<16x128xf32>
    %41 = arith.truncf %40 : vector<16x128xf32> to vector<16x128xbf16>
    %42 = arith.truncf %35 : vector<16x128xf32> to vector<16x128xbf16>
    %c127_i32 = arith.constant 127 : i32
    %43 = tpu.dynamic_rotate %35 by %c127_i32 dim 1 : vector<16x128xf32>, i32 -> vector<16x128xf32>
    %c127_i32_25 = arith.constant 127 : i32
    %44 = vector.broadcast %c127_i32_25 : i32 to vector<16x128xi32>
    %45 = arith.cmpi slt, %5, %44 : vector<16x128xi32>
    %cst_26 = arith.constant 0.000000e+00 : f32
    %46 = vector.broadcast %cst_26 : f32 to vector<16x128xf32>
    %47 = arith.select %45, %43, %46 : vector<16x128xi1>, vector<16x128xf32>
    %48 = arith.truncf %47 : vector<16x128xf32> to vector<16x128xbf16>
    %49 = tpu.concatenate %41, %42, %48 in 0 : vector<16x128xbf16>, vector<16x128xbf16>, vector<16x128xbf16> -> vector<48x128xbf16>
    %c0_27 = arith.constant 0 : index
    %c0_28 = arith.constant 0 : index
    %c0_29 = arith.constant 0 : index
    %50 = vector.load %arg4[%c0_27, %c0_28, %c0_29] : memref<3x8x112xbf16, #tpu.memory_space<vmem>>, vector<1x8x48xbf16>
    %51 = vector.shape_cast %50 : vector<1x8x48xbf16> to vector<8x48xbf16>
    %cst_30 = arith.constant dense<0.000000e+00> : vector<8x128xf32>
    %52 = tpu.matmul %51, %49, %cst_30 {dimension_numbers = #tpu.dot_dimension_numbers<[1], [0], [0], [1], [0, 0, 1, 1], [], []>} : vector<8x48xbf16>, vector<48x128xbf16>, vector<8x128xf32> -> vector<8x128xf32>
    %c0_31 = arith.constant 0 : index
    %c16 = arith.constant 16 : index
    %c0_32 = arith.constant 0 : index
    %53 = vector.load %arg5[%c0_31, %c16, %c0_32] : memref<1x40x128xf32, #tpu.memory_space<vmem>>, vector<1x8x128xf32>
    %54 = vector.shape_cast %53 : vector<1x8x128xf32> to vector<8x128xf32>
    %55 = vector.shape_cast %52 : vector<8x128xf32> to vector<1x8x128xf32>
    tpu.vector_store %arg5[%c0_31, %c16, %c0_32], %55 {strides = array<i32>} : memref<1x40x128xf32, #tpu.memory_space<vmem>>, vector<1x8x128xf32>,
    %c1_33 = arith.constant 1 : index
    %c0_34 = arith.constant 0 : index
    %c0_35 = arith.constant 0 : index
    %c0_36 = arith.constant 0 : index
    %56 = vector.load %arg2[%c1_33, %c0_34, %c0_35, %c0_36] : memref<3x3x32x1xf32, #tpu.memory_space<vmem>>, vector<1x1x24x1xf32>
    %57 = vector.shape_cast %56 : vector<1x1x24x1xf32> to vector<24x1xf32>
    %c1_37 = arith.constant 1 : index
    %c1_38 = arith.constant 1 : index
    %c0_39 = arith.constant 0 : index
    %c0_40 = arith.constant 0 : index
    %58 = vector.load %arg2[%c1_37, %c1_38, %c0_39, %c0_40] : memref<3x3x32x1xf32, #tpu.memory_space<vmem>>, vector<1x1x24x1xf32>
    %59 = vector.shape_cast %58 : vector<1x1x24x1xf32> to vector<24x1xf32>
    %c1_41 = arith.constant 1 : index
    %c2_42 = arith.constant 2 : index
    %c0_43 = arith.constant 0 : index
    %c0_44 = arith.constant 0 : index
    %60 = vector.load %arg2[%c1_41, %c2_42, %c0_43, %c0_44] : memref<3x3x32x1xf32, #tpu.memory_space<vmem>>, vector<1x1x16x1xf32>
    %61 = vector.shape_cast %60 : vector<1x1x16x1xf32> to vector<16x1xf32>
    %c0_45 = arith.constant 0 : index
    %c0_46 = arith.constant 0 : index
    %c0_47 = arith.constant 0 : index
    %62 = vector.load %arg5[%c0_45, %c0_46, %c0_47] : memref<1x40x128xf32, #tpu.memory_space<vmem>>, vector<1x24x128xf32>
    %63 = vector.shape_cast %62 : vector<1x24x128xf32> to vector<24x128xf32>
    %64 = vector.broadcast %57 : vector<24x1xf32> to vector<24x128xf32>
    %65 = arith.mulf %63, %64 : vector<24x128xf32>
    %66 = vector.broadcast %59 : vector<24x1xf32> to vector<24x128xf32>
    %67 = arith.addf %65, %66 : vector<24x128xf32>
    %68 = arith.negf %67 : vector<24x128xf32>
    %69 = math.exp %68 : vector<24x128xf32>
    %cst_48 = arith.constant 1.000000e+00 : f32
    %70 = vector.broadcast %cst_48 : f32 to vector<24x128xf32>
    %71 = arith.addf %70, %69 : vector<24x128xf32>
    %72 = arith.divf %70, %71 : vector<24x128xf32>
    %73 = arith.mulf %67, %72 : vector<24x128xf32>
    %c1_49 = arith.constant 1 : index
    %c0_50 = arith.constant 0 : index
    %c0_51 = arith.constant 0 : index
    %74 = vector.load %arg3[%c1_49, %c0_50, %c0_51] : memref<3x16x32xbf16, #tpu.memory_space<vmem>>, vector<1x16x24xbf16>
    %75 = vector.shape_cast %74 : vector<1x16x24xbf16> to vector<16x24xbf16>
    %76 = arith.truncf %73 : vector<24x128xf32> to vector<24x128xbf16>
    %cst_52 = arith.constant dense<0.000000e+00> : vector<16x128xf32>
    %77 = tpu.matmul %75, %76, %cst_52 {dimension_numbers = #tpu.dot_dimension_numbers<[1], [0], [0], [1], [0, 0, 1, 1], [], []>} : vector<16x24xbf16>, vector<24x128xbf16>, vector<16x128xf32> -> vector<16x128xf32>
    %78 = vector.broadcast %61 : vector<16x1xf32> to vector<16x128xf32>
    %79 = arith.addf %77, %78 : vector<16x128xf32>
    %80 = arith.negf %79 : vector<16x128xf32>
    %81 = math.exp %80 : vector<16x128xf32>
    %cst_53 = arith.constant 1.000000e+00 : f32
    %82 = vector.broadcast %cst_53 : f32 to vector<16x128xf32>
    %83 = arith.addf %82, %81 : vector<16x128xf32>
    %84 = arith.divf %82, %83 : vector<16x128xf32>
    %85 = arith.mulf %79, %84 : vector<16x128xf32>
    %c2_i32 = arith.constant 2 : i32
    %86 = tpu.dynamic_rotate %85 by %c2_i32 dim 1 : vector<16x128xf32>, i32 -> vector<16x128xf32>
    %c2_i32_54 = arith.constant 2 : i32
    %87 = vector.broadcast %c2_i32_54 : i32 to vector<16x128xi32>
    %88 = arith.cmpi sge, %5, %87 : vector<16x128xi32>
    %cst_55 = arith.constant 0.000000e+00 : f32
    %89 = vector.broadcast %cst_55 : f32 to vector<16x128xf32>
    %90 = arith.select %88, %86, %89 : vector<16x128xi1>, vector<16x128xf32>
    %91 = arith.truncf %90 : vector<16x128xf32> to vector<16x128xbf16>
    %c1_i32_56 = arith.constant 1 : i32
    %92 = tpu.dynamic_rotate %85 by %c1_i32_56 dim 1 : vector<16x128xf32>, i32 -> vector<16x128xf32>
    %c1_i32_57 = arith.constant 1 : i32
    %93 = vector.broadcast %c1_i32_57 : i32 to vector<16x128xi32>
    %94 = arith.cmpi sge, %5, %93 : vector<16x128xi32>
    %cst_58 = arith.constant 0.000000e+00 : f32
    %95 = vector.broadcast %cst_58 : f32 to vector<16x128xf32>
    %96 = arith.select %94, %92, %95 : vector<16x128xi1>, vector<16x128xf32>
    %97 = arith.truncf %96 : vector<16x128xf32> to vector<16x128xbf16>
    %98 = arith.truncf %85 : vector<16x128xf32> to vector<16x128xbf16>
    %c127_i32_59 = arith.constant 127 : i32
    %99 = tpu.dynamic_rotate %85 by %c127_i32_59 dim 1 : vector<16x128xf32>, i32 -> vector<16x128xf32>
    %c127_i32_60 = arith.constant 127 : i32
    %100 = vector.broadcast %c127_i32_60 : i32 to vector<16x128xi32>
    %101 = arith.cmpi slt, %5, %100 : vector<16x128xi32>
    %cst_61 = arith.constant 0.000000e+00 : f32
    %102 = vector.broadcast %cst_61 : f32 to vector<16x128xf32>
    %103 = arith.select %101, %99, %102 : vector<16x128xi1>, vector<16x128xf32>
    %104 = arith.truncf %103 : vector<16x128xf32> to vector<16x128xbf16>
    %c126_i32 = arith.constant 126 : i32
    %105 = tpu.dynamic_rotate %85 by %c126_i32 dim 1 : vector<16x128xf32>, i32 -> vector<16x128xf32>
    %c126_i32_62 = arith.constant 126 : i32
    %106 = vector.broadcast %c126_i32_62 : i32 to vector<16x128xi32>
    %107 = arith.cmpi slt, %5, %106 : vector<16x128xi32>
    %cst_63 = arith.constant 0.000000e+00 : f32
    %108 = vector.broadcast %cst_63 : f32 to vector<16x128xf32>
    %109 = arith.select %107, %105, %108 : vector<16x128xi1>, vector<16x128xf32>
    %110 = arith.truncf %109 : vector<16x128xf32> to vector<16x128xbf16>
    %111 = tpu.concatenate %91, %97, %98, %104, %110 in 0 : vector<16x128xbf16>, vector<16x128xbf16>, vector<16x128xbf16>, vector<16x128xbf16>, vector<16x128xbf16> -> vector<80x128xbf16>
    %c1_64 = arith.constant 1 : index
    %c0_65 = arith.constant 0 : index
    %c0_66 = arith.constant 0 : index
    %112 = vector.load %arg4[%c1_64, %c0_65, %c0_66] : memref<3x8x112xbf16, #tpu.memory_space<vmem>>, vector<1x8x80xbf16>
    %113 = vector.shape_cast %112 : vector<1x8x80xbf16> to vector<8x80xbf16>
    %cst_67 = arith.constant dense<0.000000e+00> : vector<8x128xf32>
    %114 = tpu.matmul %113, %111, %cst_67 {dimension_numbers = #tpu.dot_dimension_numbers<[1], [0], [0], [1], [0, 0, 1, 1], [], []>} : vector<8x80xbf16>, vector<80x128xbf16>, vector<8x128xf32> -> vector<8x128xf32>
    %c0_68 = arith.constant 0 : index
    %c24 = arith.constant 24 : index
    %c0_69 = arith.constant 0 : index
    %115 = vector.load %arg5[%c0_68, %c24, %c0_69] : memref<1x40x128xf32, #tpu.memory_space<vmem>>, vector<1x8x128xf32>
    %116 = vector.shape_cast %115 : vector<1x8x128xf32> to vector<8x128xf32>
    %117 = vector.shape_cast %114 : vector<8x128xf32> to vector<1x8x128xf32>
    tpu.vector_store %arg5[%c0_68, %c24, %c0_69], %117 {strides = array<i32>} : memref<1x40x128xf32, #tpu.memory_space<vmem>>, vector<1x8x128xf32>,
    %c2_70 = arith.constant 2 : index
    %c0_71 = arith.constant 0 : index
    %c0_72 = arith.constant 0 : index
    %c0_73 = arith.constant 0 : index
    %118 = vector.load %arg2[%c2_70, %c0_71, %c0_72, %c0_73] : memref<3x3x32x1xf32, #tpu.memory_space<vmem>>, vector<1x1x32x1xf32>
    %119 = vector.shape_cast %118 : vector<1x1x32x1xf32> to vector<32x1xf32>
    %c2_74 = arith.constant 2 : index
    %c1_75 = arith.constant 1 : index
    %c0_76 = arith.constant 0 : index
    %c0_77 = arith.constant 0 : index
    %120 = vector.load %arg2[%c2_74, %c1_75, %c0_76, %c0_77] : memref<3x3x32x1xf32, #tpu.memory_space<vmem>>, vector<1x1x32x1xf32>
    %121 = vector.shape_cast %120 : vector<1x1x32x1xf32> to vector<32x1xf32>
    %c2_78 = arith.constant 2 : index
    %c2_79 = arith.constant 2 : index
    %c0_80 = arith.constant 0 : index
    %c0_81 = arith.constant 0 : index
    %122 = vector.load %arg2[%c2_78, %c2_79, %c0_80, %c0_81] : memref<3x3x32x1xf32, #tpu.memory_space<vmem>>, vector<1x1x16x1xf32>
    %123 = vector.shape_cast %122 : vector<1x1x16x1xf32> to vector<16x1xf32>
    %c0_82 = arith.constant 0 : index
    %c0_83 = arith.constant 0 : index
    %c0_84 = arith.constant 0 : index
    %124 = vector.load %arg5[%c0_82, %c0_83, %c0_84] : memref<1x40x128xf32, #tpu.memory_space<vmem>>, vector<1x32x128xf32>
    %125 = vector.shape_cast %124 : vector<1x32x128xf32> to vector<32x128xf32>
    %126 = vector.broadcast %119 : vector<32x1xf32> to vector<32x128xf32>
    %127 = arith.mulf %125, %126 : vector<32x128xf32>
    %128 = vector.broadcast %121 : vector<32x1xf32> to vector<32x128xf32>
    %129 = arith.addf %127, %128 : vector<32x128xf32>
    %130 = arith.negf %129 : vector<32x128xf32>
    %131 = math.exp %130 : vector<32x128xf32>
    %cst_85 = arith.constant 1.000000e+00 : f32
    %132 = vector.broadcast %cst_85 : f32 to vector<32x128xf32>
    %133 = arith.addf %132, %131 : vector<32x128xf32>
    %134 = arith.divf %132, %133 : vector<32x128xf32>
    %135 = arith.mulf %129, %134 : vector<32x128xf32>
    %c2_86 = arith.constant 2 : index
    %c0_87 = arith.constant 0 : index
    %c0_88 = arith.constant 0 : index
    %136 = vector.load %arg3[%c2_86, %c0_87, %c0_88] : memref<3x16x32xbf16, #tpu.memory_space<vmem>>, vector<1x16x32xbf16>
    %137 = vector.shape_cast %136 : vector<1x16x32xbf16> to vector<16x32xbf16>
    %138 = arith.truncf %135 : vector<32x128xf32> to vector<32x128xbf16>
    %cst_89 = arith.constant dense<0.000000e+00> : vector<16x128xf32>
    %139 = tpu.matmul %137, %138, %cst_89 {dimension_numbers = #tpu.dot_dimension_numbers<[1], [0], [0], [1], [0, 0, 1, 1], [], []>} : vector<16x32xbf16>, vector<32x128xbf16>, vector<16x128xf32> -> vector<16x128xf32>
    %140 = vector.broadcast %123 : vector<16x1xf32> to vector<16x128xf32>
    %141 = arith.addf %139, %140 : vector<16x128xf32>
    %142 = arith.negf %141 : vector<16x128xf32>
    %143 = math.exp %142 : vector<16x128xf32>
    %cst_90 = arith.constant 1.000000e+00 : f32
    %144 = vector.broadcast %cst_90 : f32 to vector<16x128xf32>
    %145 = arith.addf %144, %143 : vector<16x128xf32>
    %146 = arith.divf %144, %145 : vector<16x128xf32>
    %147 = arith.mulf %141, %146 : vector<16x128xf32>
    %c3_i32 = arith.constant 3 : i32
    %148 = tpu.dynamic_rotate %147 by %c3_i32 dim 1 : vector<16x128xf32>, i32 -> vector<16x128xf32>
    %c3_i32_91 = arith.constant 3 : i32
    %149 = vector.broadcast %c3_i32_91 : i32 to vector<16x128xi32>
    %150 = arith.cmpi sge, %5, %149 : vector<16x128xi32>
    %cst_92 = arith.constant 0.000000e+00 : f32
    %151 = vector.broadcast %cst_92 : f32 to vector<16x128xf32>
    %152 = arith.select %150, %148, %151 : vector<16x128xi1>, vector<16x128xf32>
    %153 = arith.truncf %152 : vector<16x128xf32> to vector<16x128xbf16>
    %c2_i32_93 = arith.constant 2 : i32
    %154 = tpu.dynamic_rotate %147 by %c2_i32_93 dim 1 : vector<16x128xf32>, i32 -> vector<16x128xf32>
    %c2_i32_94 = arith.constant 2 : i32
    %155 = vector.broadcast %c2_i32_94 : i32 to vector<16x128xi32>
    %156 = arith.cmpi sge, %5, %155 : vector<16x128xi32>
    %cst_95 = arith.constant 0.000000e+00 : f32
    %157 = vector.broadcast %cst_95 : f32 to vector<16x128xf32>
    %158 = arith.select %156, %154, %157 : vector<16x128xi1>, vector<16x128xf32>
    %159 = arith.truncf %158 : vector<16x128xf32> to vector<16x128xbf16>
    %c1_i32_96 = arith.constant 1 : i32
    %160 = tpu.dynamic_rotate %147 by %c1_i32_96 dim 1 : vector<16x128xf32>, i32 -> vector<16x128xf32>
    %c1_i32_97 = arith.constant 1 : i32
    %161 = vector.broadcast %c1_i32_97 : i32 to vector<16x128xi32>
    %162 = arith.cmpi sge, %5, %161 : vector<16x128xi32>
    %cst_98 = arith.constant 0.000000e+00 : f32
    %163 = vector.broadcast %cst_98 : f32 to vector<16x128xf32>
    %164 = arith.select %162, %160, %163 : vector<16x128xi1>, vector<16x128xf32>
    %165 = arith.truncf %164 : vector<16x128xf32> to vector<16x128xbf16>
    %166 = arith.truncf %147 : vector<16x128xf32> to vector<16x128xbf16>
    %c127_i32_99 = arith.constant 127 : i32
    %167 = tpu.dynamic_rotate %147 by %c127_i32_99 dim 1 : vector<16x128xf32>, i32 -> vector<16x128xf32>
    %c127_i32_100 = arith.constant 127 : i32
    %168 = vector.broadcast %c127_i32_100 : i32 to vector<16x128xi32>
    %169 = arith.cmpi slt, %5, %168 : vector<16x128xi32>
    %cst_101 = arith.constant 0.000000e+00 : f32
    %170 = vector.broadcast %cst_101 : f32 to vector<16x128xf32>
    %171 = arith.select %169, %167, %170 : vector<16x128xi1>, vector<16x128xf32>
    %172 = arith.truncf %171 : vector<16x128xf32> to vector<16x128xbf16>
    %c126_i32_102 = arith.constant 126 : i32
    %173 = tpu.dynamic_rotate %147 by %c126_i32_102 dim 1 : vector<16x128xf32>, i32 -> vector<16x128xf32>
    %c126_i32_103 = arith.constant 126 : i32
    %174 = vector.broadcast %c126_i32_103 : i32 to vector<16x128xi32>
    %175 = arith.cmpi slt, %5, %174 : vector<16x128xi32>
    %cst_104 = arith.constant 0.000000e+00 : f32
    %176 = vector.broadcast %cst_104 : f32 to vector<16x128xf32>
    %177 = arith.select %175, %173, %176 : vector<16x128xi1>, vector<16x128xf32>
    %178 = arith.truncf %177 : vector<16x128xf32> to vector<16x128xbf16>
    %c125_i32 = arith.constant 125 : i32
    %179 = tpu.dynamic_rotate %147 by %c125_i32 dim 1 : vector<16x128xf32>, i32 -> vector<16x128xf32>
    %c125_i32_105 = arith.constant 125 : i32
    %180 = vector.broadcast %c125_i32_105 : i32 to vector<16x128xi32>
    %181 = arith.cmpi slt, %5, %180 : vector<16x128xi32>
    %cst_106 = arith.constant 0.000000e+00 : f32
    %182 = vector.broadcast %cst_106 : f32 to vector<16x128xf32>
    %183 = arith.select %181, %179, %182 : vector<16x128xi1>, vector<16x128xf32>
    %184 = arith.truncf %183 : vector<16x128xf32> to vector<16x128xbf16>
    %185 = tpu.concatenate %153, %159, %165, %166, %172, %178, %184 in 0 : vector<16x128xbf16>, vector<16x128xbf16>, vector<16x128xbf16>, vector<16x128xbf16>, vector<16x128xbf16>, vector<16x128xbf16>, vector<16x128xbf16> -> vector<112x128xbf16>
    %c2_107 = arith.constant 2 : index
    %c0_108 = arith.constant 0 : index
    %c0_109 = arith.constant 0 : index
    %186 = vector.load %arg4[%c2_107, %c0_108, %c0_109] : memref<3x8x112xbf16, #tpu.memory_space<vmem>>, vector<1x8x112xbf16>
    %187 = vector.shape_cast %186 : vector<1x8x112xbf16> to vector<8x112xbf16>
    %cst_110 = arith.constant dense<0.000000e+00> : vector<8x128xf32>
    %188 = tpu.matmul %187, %185, %cst_110 {dimension_numbers = #tpu.dot_dimension_numbers<[1], [0], [0], [1], [0, 0, 1, 1], [], []>} : vector<8x112xbf16>, vector<112x128xbf16>, vector<8x128xf32> -> vector<8x128xf32>
    %c0_111 = arith.constant 0 : index
    %c32 = arith.constant 32 : index
    %c0_112 = arith.constant 0 : index
    %189 = vector.load %arg5[%c0_111, %c32, %c0_112] : memref<1x40x128xf32, #tpu.memory_space<vmem>>, vector<1x8x128xf32>
    %190 = vector.shape_cast %189 : vector<1x8x128xf32> to vector<8x128xf32>
    %191 = vector.shape_cast %188 : vector<8x128xf32> to vector<1x8x128xf32>
    tpu.vector_store %arg5[%c0_111, %c32, %c0_112], %191 {strides = array<i32>} : memref<1x40x128xf32, #tpu.memory_space<vmem>>, vector<1x8x128xf32>,
    return
  }
  func.func @transform_0(%arg0: i32) -> (i32, i32, i32) {
    %c0_i32 = arith.constant 0 : i32
    %c0_i32_0 = arith.constant 0 : i32
    %c0_i32_1 = arith.constant 0 : i32
    return %arg0, %c0_i32, %c0_i32_0 : i32, i32, i32
  }
  func.func @transform_1(%arg0: i32) -> (i32, i32, i32, i32) {
    %c0_i32 = arith.constant 0 : i32
    %c0_i32_0 = arith.constant 0 : i32
    %c0_i32_1 = arith.constant 0 : i32
    %c0_i32_2 = arith.constant 0 : i32
    %c0_i32_3 = arith.constant 0 : i32
    return %c0_i32, %c0_i32_0, %c0_i32_1, %c0_i32_2 : i32, i32, i32, i32
  }
  func.func @transform_2(%arg0: i32) -> (i32, i32, i32) {
    %c0_i32 = arith.constant 0 : i32
    %c0_i32_0 = arith.constant 0 : i32
    %c0_i32_1 = arith.constant 0 : i32
    %c0_i32_2 = arith.constant 0 : i32
    return %c0_i32, %c0_i32_0, %c0_i32_1 : i32, i32, i32
  }
  func.func @transform_3(%arg0: i32) -> (i32, i32, i32) {
    %c0_i32 = arith.constant 0 : i32
    %c0_i32_0 = arith.constant 0 : i32
    %c0_i32_1 = arith.constant 0 : i32
    %c0_i32_2 = arith.constant 0 : i32
    return %c0_i32, %c0_i32_0, %c0_i32_1 : i32, i32, i32
  }
  func.func @transform_4(%arg0: i32) -> (i32, i32, i32) {
    %c0_i32 = arith.constant 0 : i32
    %c0_i32_0 = arith.constant 0 : i32
    %c0_i32_1 = arith.constant 0 : i32
    return %arg0, %c0_i32, %c0_i32_0 : i32, i32, i32
  }
}

</mosaic_0001>

<llo_original>
// kernel: dense_block_pallas.1
$region0: #{dense_block_pallas.1}
  #allocation0 [shape = 'u32[]', space=smem, size = 0x4, offset = 0x4, fixed_abs, tag = 'smem constant byte address 0x4 - core index']
  #allocation1 [shape = 'u32[72,128]{1,0:T(1,128)}', space=vmem, size = 0x9000, scoped, tag = 'internal scratch']
  %s0 = inlined_call_operand.vmem [shape: f32[2,16,128], index: 0, kind: input, shape index: {}]
  %s1 = inlined_call_operand.vmem [shape: f32[3,3,32,1], index: 1, kind: input, shape index: {}]
  %s2 = inlined_call_operand.vmem [shape: bf16[3,16,32], index: 2, kind: input, shape index: {}]
  %s3 = inlined_call_operand.vmem [shape: bf16[3,8,112], index: 3, kind: input, shape index: {}]
  %s4 = inlined_call_operand.hbm [shape: f32[2,40,128], index: 4, kind: output, shape index: {}]
  %s5 = sld [smem:[#allocation0]]
  $region49: #{dense_block_pallas.1} parent=0
    _
  %s7 = ssub.s32 1, %s5
  %s8 = scalar_select 0, %s7, %s5
  $region1: #{dense_block_pallas.1} parent=0
    #allocation2 [shape = 'u8[40960]{0}', space=vmem, size = 0xa000, scoped, tag = 'output window, operand 0']
    #allocation3 [shape = 's32[2]{0}', space=sflag, size = 0x8, scoped, tag = 'scoped memory for dense_block_pallas.1']
    %9 = vsyncpa [#allocation3], 0
    %s10 = scalar_lea.sflag [#allocation3], 1
    %11 = vsyncpa %s10, 0
    loop: start=0, step=1, limit=4
    $region2: #{dense_block_pallas.1} parent=1 // loop_pre_header
      _
    $region3: #{dense_block_pallas.1} parent=1 // loop_header
      %s13 = sphi 0, %s17
      %p14 = scmp.ge.s32.totalorder %s13, 4
      %s23 = sphi 0, %s25
      %s26 = sphi 0, %s23
      %s27 = sphi 0, %s26
      %s43 = sphi 0, %s27
      %s47 = sphi 0, %s47
      %s49 = sphi 0, %s47
      %s50 = sphi 0, %s49
      %s64 = sphi 0, %s50
      %s68 = sphi 0, %s68
      %s70 = sphi 0, %s68
      %s71 = sphi 0, %s70
      %s85 = sphi 0, %s71
      %s89 = sphi 0, %s89
      %s91 = sphi 0, %s89
      %s92 = sphi 0, %s91
      %s106 = sphi 0, %s92
      %s112 = sphi 0, %s114
      %s115 = sphi 0, %s112
      %s116 = sphi 0, %s115
      %s132 = sphi 0, %s116
    $region4: #{dense_block_pallas.1} parent=1 // loop_header_branch
      %16 = sbr.rel (%p14) target = $region8
    $region5: #{dense_block_pallas.1} parent=1 // loop_body
      %s18 = ssub.s32 %s13, 1
      %s19 = ssub.s32 %s13, 2
      %s20 = sadd.s32 %s13, 1
      %s21 = ssub.s32 %s13, %s20
      %p22 = scmp.eq.s32.totalorder %s21, 0
      %s24 = sadd.s32 %s23, 1
      %s25 = scalar_select %p22, %s23, %s24
      %p28 = pneg %p22
      %p29 = scmp.eq.s32.totalorder %s13, 1
      %p30 = por %p28, %p29
      %p31 = scmp.ne.s32.totalorder %s23, %s26
      %p32 = scmp.eq.s32.totalorder %s13, 0
      %p33 = por %p31, %p32
      %p34 = scmp.ne.s32.totalorder %s23, %s26
      %p35 = scmp.eq.s32.totalorder %s18, 1
      %p36 = por %p34, %p35
      %p37 = scmp.ne.s32.totalorder %s26, %s27
      %p38 = scmp.eq.s32.totalorder %s18, 0
      %p39 = por %p37, %p38
      %p40 = scmp.ne.s32.totalorder %s26, %s27
      %p41 = scmp.eq.s32.totalorder %s19, 1
      %p42 = por %p40, %p41
      %p44 = scmp.ne.s32.totalorder %s27, %s43
      %p45 = scmp.eq.s32.totalorder %s19, 0
      %p46 = por %p44, %p45
      %s48 = sadd.s32 %s47, 1
      %p51 = scmp.eq.s32.totalorder %s13, 1
      %p52 = scmp.ne.s32.totalorder %s47, %s49
      %p53 = scmp.eq.s32.totalorder %s13, 0
      %p54 = por %p52, %p53
      %p55 = scmp.ne.s32.totalorder %s47, %s49
      %p56 = scmp.eq.s32.totalorder %s18, 1
      %p57 = por %p55, %p56
      %p58 = scmp.ne.s32.totalorder %s49, %s50
      %p59 = scmp.eq.s32.totalorder %s18, 0
      %p60 = por %p58, %p59
      %p61 = scmp.ne.s32.totalorder %s49, %s50
      %p62 = scmp.eq.s32.totalorder %s19, 1
      %p63 = por %p61, %p62
      %p65 = scmp.ne.s32.totalorder %s50, %s64
      %p66 = scmp.eq.s32.totalorder %s19, 0
      %p67 = por %p65, %p66
      %s69 = sadd.s32 %s68, 1
      %p72 = scmp.eq.s32.totalorder %s13, 1
      %p73 = scmp.ne.s32.totalorder %s68, %s70
      %p74 = scmp.eq.s32.totalorder %s13, 0
      %p75 = por %p73, %p74
      %p76 = scmp.ne.s32.totalorder %s68, %s70
      %p77 = scmp.eq.s32.totalorder %s18, 1
      %p78 = por %p76, %p77
      %p79 = scmp.ne.s32.totalorder %s70, %s71
      %p80 = scmp.eq.s32.totalorder %s18, 0
      %p81 = por %p79, %p80
      %p82 = scmp.ne.s32.totalorder %s70, %s71
      %p83 = scmp.eq.s32.totalorder %s19, 1
      %p84 = por %p82, %p83
      %p86 = scmp.ne.s32.totalorder %s71, %s85
      %p87 = scmp.eq.s32.totalorder %s19, 0
      %p88 = por %p86, %p87
      %s90 = sadd.s32 %s89, 1
      %p93 = scmp.eq.s32.totalorder %s13, 1
      %p94 = scmp.ne.s32.totalorder %s89, %s91
      %p95 = scmp.eq.s32.totalorder %s13, 0
      %p96 = por %p94, %p95
      %p97 = scmp.ne.s32.totalorder %s89, %s91
      %p98 = scmp.eq.s32.totalorder %s18, 1
      %p99 = por %p97, %p98
      %p100 = scmp.ne.s32.totalorder %s91, %s92
      %p101 = scmp.eq.s32.totalorder %s18, 0
      %p102 = por %p100, %p101
      %p103 = scmp.ne.s32.totalorder %s91, %s92
      %p104 = scmp.eq.s32.totalorder %s19, 1
      %p105 = por %p103, %p104
      %p107 = scmp.ne.s32.totalorder %s92, %s106
      %p108 = scmp.eq.s32.totalorder %s19, 0
      %p109 = por %p107, %p108
      %s110 = ssub.s32 %s13, %s20
      %p111 = scmp.eq.s32.totalorder %s110, 0
      %s113 = sadd.s32 %s112, 1
      %s114 = scalar_select %p111, %s112, %s113
      %p117 = pneg %p111
      %p118 = scmp.eq.s32.totalorder %s13, 1
      %p119 = por %p117, %p118
      %p120 = scmp.ne.s32.totalorder %s112, %s115
      %p121 = scmp.eq.s32.totalorder %s13, 0
      %p122 = por %p120, %p121
      %p123 = scmp.ne.s32.totalorder %s112, %s115
      %p124 = scmp.eq.s32.totalorder %s18, 1
      %p125 = por %p123, %p124
      %p126 = scmp.ne.s32.totalorder %s115, %s116
      %p127 = scmp.eq.s32.totalorder %s18, 0
      %p128 = por %p126, %p127
      %p129 = scmp.ne.s32.totalorder %s115, %s116
      %p130 = scmp.eq.s32.totalorder %s19, 1
      %p131 = por %p129, %p130
      %p133 = scmp.ne.s32.totalorder %s116, %s132
      %p134 = scmp.eq.s32.totalorder %s19, 0
      %p135 = por %p133, %p134
      %p136 = scmp.le.s32.totalorder 1, %s13
      %p137 = scmp.lt.s32.totalorder %s13, 3
      %p138 = pnand %p136, %p137
      %p139 = pneg %p138
      // Predicated region
      $region9: #{dense_block_pallas.1} parent=5 // pred_check
        _
      $region10: #{dense_block_pallas.1} parent=5 // pred_check_branch
        %141 = sbr.rel (%p138) target = $region12
      $region11: #{dense_block_pallas.1} parent=5 // pred_region
        %s142 = ssub.s32 %s13, 1
        // Predicated region
        $region13: #{dense_block_pallas.1} parent=11 // pred_check
          %p143 = pneg %p60
        $region14: #{dense_block_pallas.1} parent=11 // pred_check_branch
          %145 = sbr.rel (%p143) target = $region16
        $region15: #{dense_block_pallas.1} parent=11 // pred_region
          _
        $region16: #{dense_block_pallas.1} parent=11 // pred_fallthru
          _
        // Predicated region
        $region17: #{dense_block_pallas.1} parent=11 // pred_check
          %p146 = pneg %p81
        $region18: #{dense_block_pallas.1} parent=11 // pred_check_branch
          %148 = sbr.rel (%p146) target = $region20
        $region19: #{dense_block_pallas.1} parent=11 // pred_region
          _
        $region20: #{dense_block_pallas.1} parent=11 // pred_fallthru
          _
        // Predicated region
        $region21: #{dense_block_pallas.1} parent=11 // pred_check
          %p149 = pneg %p102
        $region22: #{dense_block_pallas.1} parent=11 // pred_check_branch
          %151 = sbr.rel (%p149) target = $region24
        $region23: #{dense_block_pallas.1} parent=11 // pred_region
          _
        $region24: #{dense_block_pallas.1} parent=11 // pred_fallthru
          _
      $region12: #{dense_block_pallas.1} parent=5 // pred_fallthru
        _
      %p152 = scmp.lt.s32.totalorder %s13, 2
      // Predicated region
      $region25: #{dense_block_pallas.1} parent=5 // pred_check
        %p153 = pneg %p152
      $region26: #{dense_block_pallas.1} parent=5 // pred_check_branch
        %155 = sbr.rel (%p153) target = $region28
      $region27: #{dense_block_pallas.1} parent=5 // pred_region
        // Predicated region
        $region29: #{dense_block_pallas.1} parent=27 // pred_check
          %p156 = pneg %p33
        $region30: #{dense_block_pallas.1} parent=27 // pred_check_branch
          %158 = sbr.rel (%p156) target = $region32
        $region31: #{dense_block_pallas.1} parent=27 // pred_region
          %p159 = scmp.lt.s32.totalorder %s13, 1
          %s160 = scalar_select %p159, %s13, 1
          %s161 = smul.addr %s160, 2
          %s162 = smul.addr %s161, 8
          %s163 = scalar_lea.vmem %s0, %s162
        $region32: #{dense_block_pallas.1} parent=27 // pred_fallthru
          _
      $region28: #{dense_block_pallas.1} parent=5 // pred_fallthru
        _
      %p164 = scmp.le.s32.totalorder 1, %s13
      %p165 = scmp.lt.s32.totalorder %s13, 3
      %p166 = pnand %p164, %p165
      %p167 = pneg %p166
      // Predicated region
      $region33: #{dense_block_pallas.1} parent=5 // pred_check
        _
      $region34: #{dense_block_pallas.1} parent=5 // pred_check_branch
        %169 = sbr.rel (%p166) target = $region36
      $region35: #{dense_block_pallas.1} parent=5 // pred_region
        %s170 = ssub.s32 %s13, 1
        %p171 = scmp.lt.s32.totalorder %s18, 1
        %s172 = scalar_select %p171, %s18, 1
        %s173 = smul.addr %s172, 2
        %s174 = smul.addr %s173, 8
        %s175 = scalar_lea.vmem %s0, %s174
        %p176 = pneg %p39
        %p177 = pneg %p36
        %p178 = pneg %p60
        %p179 = pneg %p57
        %p180 = pneg %p81
        %p181 = pneg %p78
        %p182 = pneg %p102
        %p183 = pneg %p99
        %p184 = pneg %p128
        %p185 = pneg %p125
        %s186 = sand.u32 %s115, 1
        %s187 = scalar_lea.sflag [#allocation3], %s186
        %s188 = sand.u32 %s115, 1
        %s189 = smul.addr %s188, 40
        %s190 = scalar_lea.vmem [#allocation2], %s189
        %p191 = scmp.lt.s32.totalorder %s18, 1
        %s192 = scalar_select %p191, %s18, 1
        %s193 = smul.addr %s192, 2
        %s194 = smul.addr %s193, 8
        %s195 = scalar_lea.vmem %s0, %s194
        %v197 = vld [vmem:[%s195] sm:$0xff]
        %v198 = vld [vmem:[%s195 + $0x8] sm:$0xff]
        %199 = vst [vmem:[%s190] sm:$0xff] %v197
        %200 = vst [vmem:[%s190 + $0x8] sm:$0xff] %v198
        %v201 = vlaneseq
        %v202 = vand.u32 %v201, 127
        %v203 = vld [vmem:[%s1] sm:$0xff]
        %v204 = vld [vmem:[%s1 + $0x8] sm:$0xff]
        %s205 = scalar_lea.vmem %s1, 32
        %v206 = vld [vmem:[%s205] sm:$0xff]
        %v207 = vld [vmem:[%s205 + $0x8] sm:$0xff]
        %s208 = scalar_lea.vmem %s1, 64
        %v209 = vld [vmem:[%s208] sm:$0xff]
        %v210 = vld [vmem:[%s208 + $0x8] sm:$0xff]
        %v211 = vld [vmem:[%s190] sm:$0xff]
        %v212 = vld [vmem:[%s190 + $0x8] sm:$0xff]
        %214 = vset.pattern.permute.xlu0 0
        %215 = vperm.xlu0 %214, %v203
        %v216 = vpop.permute.xlu0 %215
        %219 = vset.pattern.permute.xlu0 0
        %220 = vperm.xlu0 %219, %v204
        %v221 = vpop.permute.xlu0 %220
        %v223 = vmul.f32 %v211, %v216
        %v224 = vmul.f32 %v212, %v221
        %226 = vset.pattern.permute.xlu0 0
        %227 = vperm.xlu0 %226, %v206
        %v228 = vpop.permute.xlu0 %227
        %231 = vset.pattern.permute.xlu0 0
        %232 = vperm.xlu0 %231, %v207
        %v233 = vpop.permute.xlu0 %232
        %v235 = vadd.f32 %v223, %v228
        %v236 = vadd.f32 %v224, %v233
        %v237 = vxor.u32 %v235, 2147483648
        %v238 = vxor.u32 %v236, 2147483648
        %v239 = vmul.f32 %v237, 1.442695
        %v240 = vpow.pop %v239
        %v241 = vmul.f32 %v238, 1.442695
        %v242 = vpow.pop %v241
        %v243 = vadd.f32 %v240, 1.0
        %v244 = vadd.f32 %v242, 1.0
        %v245 = vrcp.pop %v243
        %v246 = vmul.f32 %v243, %v245
        %v247 = vsub.f32 1.0, %v246
        %v248 = vmul.f32 %v245, %v247
        %v249 = vadd.f32 %v245, %v248
        %vm250 = vweird.f32 %v243
        %vm251 = vweird.f32 %v245
        %vm252 = vmor %vm250, %vm251
        %v253 = vsel %vm252, %v245, %v249
        %v254 = vand.u32 2147483647, %v243
        %vm255 = vcmp.eq.f32.partialorder %v254, 8.507059e+37
        %v256 = vand.u32 %v243, 2147483648
        %v257 = vor.u32 1.1754944e-38, %v256
        %v258 = vsel %vm255, %v257, %v253
        %v259 = vmul.f32 1.0, %v258
        %v260 = vrcp.pop %v244
        %v261 = vmul.f32 %v244, %v260
        %v262 = vsub.f32 1.0, %v261
        %v263 = vmul.f32 %v260, %v262
        %v264 = vadd.f32 %v260, %v263
        %vm265 = vweird.f32 %v244
        %vm266 = vweird.f32 %v260
        %vm267 = vmor %vm265, %vm266
        %v268 = vsel %vm267, %v260, %v264
        %v269 = vand.u32 2147483647, %v244
        %vm270 = vcmp.eq.f32.partialorder %v269, 8.507059e+37
        %v271 = vand.u32 %v244, 2147483648
        %v272 = vor.u32 1.1754944e-38, %v271
        %v273 = vsel %vm270, %v272, %v268
        %v274 = vmul.f32 1.0, %v273
        %v275 = vmul.f32 %v235, %v259
        %v276 = vmul.f32 %v236, %v274
        %v277 = vld [vmem:[%s2] sm:$0xf]
        %v278 = vld [vmem:[%s2 + $0x4] sm:$0xf]
        %v279 = vpack.c.bf16 %v276, %v275
        %281 = vset.pattern.permute.xlu0 0
        %282 = vperm.xlu0 %281, %v209
        %v283 = vpop.permute.xlu0 %282
        %286 = vset.pattern.permute.xlu0 0
        %287 = vperm.xlu0 %286, %v210
        %v288 = vpop.permute.xlu0 %287
        %v292 = vunpack.c.l.b16 %v277
        %v293 = vunpack.c.l.b16 %v278
        %v294 = vpack.c.b16 %v293, %v292
        %vm295 = vcmask 130048
        %v297 = vsel %vm295, %v294, 0
        %299 = vmatpush.bf16.msra.mxu0 0
        %300 = vmatpush.bf16.msra.mxu0 0
        %301 = vmatpush.bf16.msra.mxu0 0
        %302 = vmatpush.bf16.msra.mxu0 0
        %303 = vmatpush.bf16.msra.mxu0 0
        %304 = vmatpush.bf16.msra.mxu0 0
        %305 = vmatpush.bf16.msra.mxu0 0
        %306 = vmatpush.bf16.msra.mxu0 %v279
        %307 = vmatmul.bf16.gmra.mxu0 %v297
        %v308 = vpop.f32.mrf.mxu0
        %v309 = vadd.f32 %v283, %v308
        %v310 = vpop.f32.mrf.mxu0
        %v311 = vadd.f32 %v288, %v310
        %312 = vdwg.mxu0
        %v313 = vxor.u32 %v309, 2147483648
        %v314 = vxor.u32 %v311, 2147483648
        %v315 = vmul.f32 %v313, 1.442695
        %v316 = vpow.pop %v315
        %v317 = vmul.f32 %v314, 1.442695
        %v318 = vpow.pop %v317
        %v319 = vadd.f32 %v316, 1.0
        %v320 = vadd.f32 %v318, 1.0
        %v321 = vrcp.pop %v319
        %v322 = vmul.f32 %v319, %v321
        %v323 = vsub.f32 1.0, %v322
        %v324 = vmul.f32 %v321, %v323
        %v325 = vadd.f32 %v321, %v324
        %vm326 = vweird.f32 %v319
        %vm327 = vweird.f32 %v321
        %vm328 = vmor %vm326, %vm327
        %v329 = vsel %vm328, %v321, %v325
        %v330 = vand.u32 2147483647, %v319
        %vm331 = vcmp.eq.f32.partialorder %v330, 8.507059e+37
        %v332 = vand.u32 %v319, 2147483648
        %v333 = vor.u32 1.1754944e-38, %v332
        %v334 = vsel %vm331, %v333, %v329
        %v335 = vmul.f32 1.0, %v334
        %v336 = vrcp.pop %v320
        %v337 = vmul.f32 %v320, %v336
        %v338 = vsub.f32 1.0, %v337
        %v339 = vmul.f32 %v336, %v338
        %v340 = vadd.f32 %v336, %v339
        %vm341 = vweird.f32 %v320
        %vm342 = vweird.f32 %v336
        %vm343 = vmor %vm341, %vm342
        %v344 = vsel %vm343, %v336, %v340
        %v345 = vand.u32 2147483647, %v320
        %vm346 = vcmp.eq.f32.partialorder %v345, 8.507059e+37
        %v347 = vand.u32 %v320, 2147483648
        %v348 = vor.u32 1.1754944e-38, %v347
        %v349 = vsel %vm346, %v348, %v344
        %v350 = vmul.f32 1.0, %v349
        %v351 = vmul.f32 %v309, %v335
        %v352 = vmul.f32 %v311, %v350
        %353 = vrot.lane.b32.xlu0 %v351, 1
        %v354 = vpop.permute.xlu0 %353
        %355 = vrot.lane.b32.xlu0 %v352, 1
        %v356 = vpop.permute.xlu0 %355
        %vm357 = vcmp.ge.s32.totalorder %v202, 1
        %v358 = vsel %vm357, %v354, 0.0
        %v359 = vsel %vm357, %v356, 0.0
        %v360 = vpack.c.bf16 %v358, %v358
        %v361 = vpack.c.bf16 %v359, %v359
        %v362 = vpack.c.bf16 %v351, %v351
        %v363 = vpack.c.bf16 %v352, %v352
        %364 = vrot.lane.b32.xlu0 %v351, 127
        %v365 = vpop.permute.xlu0 %364
        %366 = vrot.lane.b32.xlu0 %v352, 127
        %v367 = vpop.permute.xlu0 %366
        %vm368 = vcmp.lt.s32.totalorder %v202, 127
        %v369 = vsel %vm368, %v365, 0.0
        %v370 = vsel %vm368, %v367, 0.0
        %v371 = vpack.c.bf16 %v369, %v369
        %v372 = vpack.c.bf16 %v370, %v370
        %v375 = vunpack.c.l.b16 %v360
        %v376 = vunpack.c.l.b16 %v361
        %v377 = vpack.c.b16 %v376, %v375
        %v381 = vunpack.c.l.b16 %v362
        %v382 = vunpack.c.l.b16 %v363
        %v383 = vpack.c.b16 %v382, %v381
        %v387 = vunpack.c.l.b16 %v371
        %v388 = vunpack.c.l.b16 %v372
        %v389 = vpack.c.b16 %v388, %v387
        %v391 = vld [vmem:[%s3] sm:$0xf]
        %vm392 = vcmask 392192
        %v394 = vsel %vm392, %v391, 0
        %396 = vmatpush.bf16.msra.mxu0 0
        %397 = vmatpush.bf16.msra.mxu0 0
        %398 = vmatpush.bf16.msra.mxu0 0
        %399 = vmatpush.bf16.msra.mxu0 0
        %400 = vmatpush.bf16.msra.mxu0 0
        %401 = vmatpush.bf16.msra.mxu0 %v389
        %402 = vmatpush.bf16.msra.mxu0 %v383
        %403 = vmatpush.bf16.msra.mxu0 %v377
        %404 = vmatmul.bf16.gmra.mxu0 %v394
        %v405 = vpop.f32.mrf.mxu0
        %v406 = vadd.f32 0.0, %v405
        %v407 = vpop.f32.mrf.mxu0
        %408 = vdwg.mxu0
        %409 = vst [vmem:[%s190 + $0x10] sm:$0xff] %v406
        %s410 = scalar_lea.vmem %s1, 96
        %v411 = vld [vmem:[%s410] sm:$0xff]
        %v412 = vld [vmem:[%s410 + $0x8] sm:$0xff]
        %v413 = vld [vmem:[%s410 + $0x10] sm:$0xff]
        %s414 = scalar_lea.vmem %s1, 128
        %v415 = vld [vmem:[%s414] sm:$0xff]
        %v416 = vld [vmem:[%s414 + $0x8] sm:$0xff]
        %v417 = vld [vmem:[%s414 + $0x10] sm:$0xff]
        %s418 = scalar_lea.vmem %s1, 160
        %v419 = vld [vmem:[%s418] sm:$0xff]
        %v420 = vld [vmem:[%s418 + $0x8] sm:$0xff]
        %v421 = vld [vmem:[%s190] sm:$0xff]
        %v422 = vld [vmem:[%s190 + $0x8] sm:$0xff]
        %v423 = vld [vmem:[%s190 + $0x10] sm:$0xff]
        %425 = vset.pattern.permute.xlu0 0
        %426 = vperm.xlu0 %425, %v411
        %v427 = vpop.permute.xlu0 %426
        %430 = vset.pattern.permute.xlu0 0
        %431 = vperm.xlu0 %430, %v412
        %v432 = vpop.permute.xlu0 %431
        %435 = vset.pattern.permute.xlu0 0
        %436 = vperm.xlu0 %435, %v413
        %v437 = vpop.permute.xlu0 %436
        %v439 = vmul.f32 %v421, %v427
        %v440 = vmul.f32 %v422, %v432
        %v441 = vmul.f32 %v423, %v437
        %443 = vset.pattern.permute.xlu0 0
        %444 = vperm.xlu0 %443, %v415
        %v445 = vpop.permute.xlu0 %444
        %448 = vset.pattern.permute.xlu0 0
        %449 = vperm.xlu0 %448, %v416
        %v450 = vpop.permute.xlu0 %449
        %453 = vset.pattern.permute.xlu0 0
        %454 = vperm.xlu0 %453, %v417
        %v455 = vpop.permute.xlu0 %454
        %v457 = vadd.f32 %v439, %v445
        %v458 = vadd.f32 %v440, %v450
        %v459 = vadd.f32 %v441, %v455
        %v460 = vxor.u32 %v457, 2147483648
        %v461 = vxor.u32 %v458, 2147483648
        %v462 = vxor.u32 %v459, 2147483648
        %v463 = vmul.f32 %v460, 1.442695
        %v464 = vpow.pop %v463
        %v465 = vmul.f32 %v461, 1.442695
        %v466 = vpow.pop %v465
        %v467 = vmul.f32 %v462, 1.442695
        %v468 = vpow.pop %v467
        %v469 = vadd.f32 %v464, 1.0
        %v470 = vadd.f32 %v466, 1.0
        %v471 = vadd.f32 %v468, 1.0
        %v472 = vrcp.pop %v469
        %v473 = vmul.f32 %v469, %v472
        %v474 = vsub.f32 1.0, %v473
        %v475 = vmul.f32 %v472, %v474
        %v476 = vadd.f32 %v472, %v475
        %vm477 = vweird.f32 %v469
        %vm478 = vweird.f32 %v472
        %vm479 = vmor %vm477, %vm478
        %v480 = vsel %vm479, %v472, %v476
        %v481 = vand.u32 2147483647, %v469
        %vm482 = vcmp.eq.f32.partialorder %v481, 8.507059e+37
        %v483 = vand.u32 %v469, 2147483648
        %v484 = vor.u32 1.1754944e-38, %v483
        %v485 = vsel %vm482, %v484, %v480
        %v486 = vmul.f32 1.0, %v485
        %v487 = vrcp.pop %v470
        %v488 = vmul.f32 %v470, %v487
        %v489 = vsub.f32 1.0, %v488
        %v490 = vmul.f32 %v487, %v489
        %v491 = vadd.f32 %v487, %v490
        %vm492 = vweird.f32 %v470
        %vm493 = vweird.f32 %v487
        %vm494 = vmor %vm492, %vm493
        %v495 = vsel %vm494, %v487, %v491
        %v496 = vand.u32 2147483647, %v470
        %vm497 = vcmp.eq.f32.partialorder %v496, 8.507059e+37
        %v498 = vand.u32 %v470, 2147483648
        %v499 = vor.u32 1.1754944e-38, %v498
        %v500 = vsel %vm497, %v499, %v495
        %v501 = vmul.f32 1.0, %v500
        %v502 = vrcp.pop %v471
        %v503 = vmul.f32 %v471, %v502
        %v504 = vsub.f32 1.0, %v503
        %v505 = vmul.f32 %v502, %v504
        %v506 = vadd.f32 %v502, %v505
        %vm507 = vweird.f32 %v471
        %vm508 = vweird.f32 %v502
        %vm509 = vmor %vm507, %vm508
        %v510 = vsel %vm509, %v502, %v506
        %v511 = vand.u32 2147483647, %v471
        %vm512 = vcmp.eq.f32.partialorder %v511, 8.507059e+37
        %v513 = vand.u32 %v471, 2147483648
        %v514 = vor.u32 1.1754944e-38, %v513
        %v515 = vsel %vm512, %v514, %v510
        %v516 = vmul.f32 1.0, %v515
        %v517 = vmul.f32 %v457, %v486
        %v518 = vmul.f32 %v458, %v501
        %v519 = vmul.f32 %v459, %v516
        %s520 = scalar_lea.vmem %s2, 8
        %v521 = vld [vmem:[%s520] sm:$0xf]
        %v522 = vld [vmem:[%s520 + $0x4] sm:$0xf]
        %v523 = vpack.c.bf16 %v518, %v517
        %v524 = vpack.c.bf16 %v519, %v519
        %526 = vset.pattern.permute.xlu0 0
        %527 = vperm.xlu0 %526, %v419
        %v528 = vpop.permute.xlu0 %527
        %531 = vset.pattern.permute.xlu0 0
        %532 = vperm.xlu0 %531, %v420
        %v533 = vpop.permute.xlu0 %532
        %v537 = vunpack.c.l.b16 %v521
        %v538 = vunpack.c.l.b16 %v522
        %v539 = vpack.c.b16 %v538, %v537
        %vm540 = vcmask 195584
        %v542 = vsel %vm540, %v539, 0
        %vm544 = vcmask 1043456
        %v546 = vsel %vm544, %v524, 0
        %548 = vmatpush.bf16.msra.mxu0 0
        %549 = vmatpush.bf16.msra.mxu0 0
        %550 = vmatpush.bf16.msra.mxu0 0
        %551 = vmatpush.bf16.msra.mxu0 0
        %552 = vmatpush.bf16.msra.mxu0 0
        %553 = vmatpush.bf16.msra.mxu0 0
        %554 = vmatpush.bf16.msra.mxu0 %v546
        %555 = vmatpush.bf16.msra.mxu0 %v523
        %556 = vmatmul.bf16.gmra.mxu0 %v542
        %v557 = vpop.f32.mrf.mxu0
        %v558 = vadd.f32 %v528, %v557
        %v559 = vpop.f32.mrf.mxu0
        %v560 = vadd.f32 %v533, %v559
        %561 = vdwg.mxu0
        %v562 = vxor.u32 %v558, 2147483648
        %v563 = vxor.u32 %v560, 2147483648
        %v564 = vmul.f32 %v562, 1.442695
        %v565 = vpow.pop %v564
        %v566 = vmul.f32 %v563, 1.442695
        %v567 = vpow.pop %v566
        %v568 = vadd.f32 %v565, 1.0
        %v569 = vadd.f32 %v567, 1.0
        %v570 = vrcp.pop %v568
        %v571 = vmul.f32 %v568, %v570
        %v572 = vsub.f32 1.0, %v571
        %v573 = vmul.f32 %v570, %v572
        %v574 = vadd.f32 %v570, %v573
        %vm575 = vweird.f32 %v568
        %vm576 = vweird.f32 %v570
        %vm577 = vmor %vm575, %vm576
        %v578 = vsel %vm577, %v570, %v574
        %v579 = vand.u32 2147483647, %v568
        %vm580 = vcmp.eq.f32.partialorder %v579, 8.507059e+37
        %v581 = vand.u32 %v568, 2147483648
        %v582 = vor.u32 1.1754944e-38, %v581
        %v583 = vsel %vm580, %v582, %v578
        %v584 = vmul.f32 1.0, %v583
        %v585 = vrcp.pop %v569
        %v586 = vmul.f32 %v569, %v585
        %v587 = vsub.f32 1.0, %v586
        %v588 = vmul.f32 %v585, %v587
        %v589 = vadd.f32 %v585, %v588
        %vm590 = vweird.f32 %v569
        %vm591 = vweird.f32 %v585
        %vm592 = vmor %vm590, %vm591
        %v593 = vsel %vm592, %v585, %v589
        %v594 = vand.u32 2147483647, %v569
        %vm595 = vcmp.eq.f32.partialorder %v594, 8.507059e+37
        %v596 = vand.u32 %v569, 2147483648
        %v597 = vor.u32 1.1754944e-38, %v596
        %v598 = vsel %vm595, %v597, %v593
        %v599 = vmul.f32 1.0, %v598
        %v600 = vmul.f32 %v558, %v584
        %v601 = vmul.f32 %v560, %v599
        %602 = vrot.lane.b32.xlu0 %v600, 2
        %v603 = vpop.permute.xlu0 %602
        %604 = vrot.lane.b32.xlu0 %v601, 2
        %v605 = vpop.permute.xlu0 %604
        %vm606 = vcmp.ge.s32.totalorder %v202, 2
        %v607 = vsel %vm606, %v603, 0.0
        %v608 = vsel %vm606, %v605, 0.0
        %v609 = vpack.c.bf16 %v607, %v607
        %v610 = vpack.c.bf16 %v608, %v608
        %611 = vrot.lane.b32.xlu0 %v600, 1
        %v612 = vpop.permute.xlu0 %611
        %613 = vrot.lane.b32.xlu0 %v601, 1
        %v614 = vpop.permute.xlu0 %613
        %v615 = vsel %vm357, %v612, 0.0
        %v616 = vsel %vm357, %v614, 0.0
        %v617 = vpack.c.bf16 %v615, %v615
        %v618 = vpack.c.bf16 %v616, %v616
        %v619 = vpack.c.bf16 %v600, %v600
        %v620 = vpack.c.bf16 %v601, %v601
        %621 = vrot.lane.b32.xlu0 %v600, 127
        %v622 = vpop.permute.xlu0 %621
        %623 = vrot.lane.b32.xlu0 %v601, 127
        %v624 = vpop.permute.xlu0 %623
        %v625 = vsel %vm368, %v622, 0.0
        %v626 = vsel %vm368, %v624, 0.0
        %v627 = vpack.c.bf16 %v625, %v625
        %v628 = vpack.c.bf16 %v626, %v626
        %629 = vrot.lane.b32.xlu0 %v600, 126
        %v630 = vpop.permute.xlu0 %629
        %631 = vrot.lane.b32.xlu0 %v601, 126
        %v632 = vpop.permute.xlu0 %631
        %vm633 = vcmp.lt.s32.totalorder %v202, 126
        %v634 = vsel %vm633, %v630, 0.0
        %v635 = vsel %vm633, %v632, 0.0
        %v636 = vpack.c.bf16 %v634, %v634
        %v637 = vpack.c.bf16 %v635, %v635
        %v640 = vunpack.c.l.b16 %v609
        %v641 = vunpack.c.l.b16 %v610
        %v642 = vpack.c.b16 %v641, %v640
        %v646 = vunpack.c.l.b16 %v617
        %v647 = vunpack.c.l.b16 %v618
        %v648 = vpack.c.b16 %v647, %v646
        %v652 = vunpack.c.l.b16 %v619
        %v653 = vunpack.c.l.b16 %v620
        %v654 = vpack.c.b16 %v653, %v652
        %v658 = vunpack.c.l.b16 %v627
        %v659 = vunpack.c.l.b16 %v628
        %v660 = vpack.c.b16 %v659, %v658
        %v664 = vunpack.c.l.b16 %v636
        %v665 = vunpack.c.l.b16 %v637
        %v666 = vpack.c.b16 %v665, %v664
        %s668 = scalar_lea.vmem %s3, 4
        %v669 = vld [vmem:[%s668] sm:$0xf]
        %vm670 = vcmask 654336
        %v672 = vsel %vm670, %v669, 0
        %674 = vmatpush.bf16.msra.mxu0 0
        %675 = vmatpush.bf16.msra.mxu0 0
        %676 = vmatpush.bf16.msra.mxu0 0
        %677 = vmatpush.bf16.msra.mxu0 %v666
        %678 = vmatpush.bf16.msra.mxu0 %v660
        %679 = vmatpush.bf16.msra.mxu0 %v654
        %680 = vmatpush.bf16.msra.mxu0 %v648
        %681 = vmatpush.bf16.msra.mxu0 %v642
        %682 = vmatmul.bf16.gmra.mxu0 %v672
        %v683 = vpop.f32.mrf.mxu0
        %v684 = vadd.f32 0.0, %v683
        %v685 = vpop.f32.mrf.mxu0
        %686 = vdwg.mxu0
        %687 = vst [vmem:[%s190 + $0x18] sm:$0xff] %v684
        %s688 = scalar_lea.vmem %s1, 192
        %v689 = vld [vmem:[%s688] sm:$0xff]
        %v690 = vld [vmem:[%s688 + $0x8] sm:$0xff]
        %v691 = vld [vmem:[%s688 + $0x10] sm:$0xff]
        %v692 = vld [vmem:[%s688 + $0x18] sm:$0xff]
        %s693 = scalar_lea.vmem %s1, 224
        %v694 = vld [vmem:[%s693] sm:$0xff]
        %v695 = vld [vmem:[%s693 + $0x8] sm:$0xff]
        %v696 = vld [vmem:[%s693 + $0x10] sm:$0xff]
        %v697 = vld [vmem:[%s693 + $0x18] sm:$0xff]
        %s698 = scalar_lea.vmem %s1, 256
        %v699 = vld [vmem:[%s698] sm:$0xff]
        %v700 = vld [vmem:[%s698 + $0x8] sm:$0xff]
        %v701 = vld [vmem:[%s190] sm:$0xff]
        %v702 = vld [vmem:[%s190 + $0x8] sm:$0xff]
        %v703 = vld [vmem:[%s190 + $0x10] sm:$0xff]
        %v704 = vld [vmem:[%s190 + $0x18] sm:$0xff]
        %706 = vset.pattern.permute.xlu0 0
        %707 = vperm.xlu0 %706, %v689
        %v708 = vpop.permute.xlu0 %707
        %711 = vset.pattern.permute.xlu0 0
        %712 = vperm.xlu0 %711, %v690
        %v713 = vpop.permute.xlu0 %712
        %716 = vset.pattern.permute.xlu0 0
        %717 = vperm.xlu0 %716, %v691
        %v718 = vpop.permute.xlu0 %717
        %721 = vset.pattern.permute.xlu0 0
        %722 = vperm.xlu0 %721, %v692
        %v723 = vpop.permute.xlu0 %722
        %v725 = vmul.f32 %v701, %v708
        %v726 = vmul.f32 %v702, %v713
        %v727 = vmul.f32 %v703, %v718
        %v728 = vmul.f32 %v704, %v723
        %730 = vset.pattern.permute.xlu0 0
        %731 = vperm.xlu0 %730, %v694
        %v732 = vpop.permute.xlu0 %731
        %735 = vset.pattern.permute.xlu0 0
        %736 = vperm.xlu0 %735, %v695
        %v737 = vpop.permute.xlu0 %736
        %740 = vset.pattern.permute.xlu0 0
        %741 = vperm.xlu0 %740, %v696
        %v742 = vpop.permute.xlu0 %741
        %745 = vset.pattern.permute.xlu0 0
        %746 = vperm.xlu0 %745, %v697
        %v747 = vpop.permute.xlu0 %746
        %v749 = vadd.f32 %v725, %v732
        %v750 = vadd.f32 %v726, %v737
        %v751 = vadd.f32 %v727, %v742
        %v752 = vadd.f32 %v728, %v747
        %v753 = vxor.u32 %v749, 2147483648
        %v754 = vxor.u32 %v750, 2147483648
        %v755 = vxor.u32 %v751, 2147483648
        %v756 = vxor.u32 %v752, 2147483648
        %v757 = vmul.f32 %v753, 1.442695
        %v758 = vpow.pop %v757
        %v759 = vmul.f32 %v754, 1.442695
        %v760 = vpow.pop %v759
        %v761 = vmul.f32 %v755, 1.442695
        %v762 = vpow.pop %v761
        %v763 = vmul.f32 %v756, 1.442695
        %v764 = vpow.pop %v763
        %v765 = vadd.f32 %v758, 1.0
        %v766 = vadd.f32 %v760, 1.0
        %v767 = vadd.f32 %v762, 1.0
        %v768 = vadd.f32 %v764, 1.0
        %v769 = vrcp.pop %v765
        %v770 = vmul.f32 %v765, %v769
        %v771 = vsub.f32 1.0, %v770
        %v772 = vmul.f32 %v769, %v771
        %v773 = vadd.f32 %v769, %v772
        %vm774 = vweird.f32 %v765
        %vm775 = vweird.f32 %v769
        %vm776 = vmor %vm774, %vm775
        %v777 = vsel %vm776, %v769, %v773
        %v778 = vand.u32 2147483647, %v765
        %vm779 = vcmp.eq.f32.partialorder %v778, 8.507059e+37
        %v780 = vand.u32 %v765, 2147483648
        %v781 = vor.u32 1.1754944e-38, %v780
        %v782 = vsel %vm779, %v781, %v777
        %v783 = vmul.f32 1.0, %v782
        %v784 = vrcp.pop %v766
        %v785 = vmul.f32 %v766, %v784
        %v786 = vsub.f32 1.0, %v785
        %v787 = vmul.f32 %v784, %v786
        %v788 = vadd.f32 %v784, %v787
        %vm789 = vweird.f32 %v766
        %vm790 = vweird.f32 %v784
        %vm791 = vmor %vm789, %vm790
        %v792 = vsel %vm791, %v784, %v788
        %v793 = vand.u32 2147483647, %v766
        %vm794 = vcmp.eq.f32.partialorder %v793, 8.507059e+37
        %v795 = vand.u32 %v766, 2147483648
        %v796 = vor.u32 1.1754944e-38, %v795
        %v797 = vsel %vm794, %v796, %v792
        %v798 = vmul.f32 1.0, %v797
        %v799 = vrcp.pop %v767
        %v800 = vmul.f32 %v767, %v799
        %v801 = vsub.f32 1.0, %v800
        %v802 = vmul.f32 %v799, %v801
        %v803 = vadd.f32 %v799, %v802
        %vm804 = vweird.f32 %v767
        %vm805 = vweird.f32 %v799
        %vm806 = vmor %vm804, %vm805
        %v807 = vsel %vm806, %v799, %v803
        %v808 = vand.u32 2147483647, %v767
        %vm809 = vcmp.eq.f32.partialorder %v808, 8.507059e+37
        %v810 = vand.u32 %v767, 2147483648
        %v811 = vor.u32 1.1754944e-38, %v810
        %v812 = vsel %vm809, %v811, %v807
        %v813 = vmul.f32 1.0, %v812
        %v814 = vrcp.pop %v768
        %v815 = vmul.f32 %v768, %v814
        %v816 = vsub.f32 1.0, %v815
        %v817 = vmul.f32 %v814, %v816
        %v818 = vadd.f32 %v814, %v817
        %vm819 = vweird.f32 %v768
        %vm820 = vweird.f32 %v814
        %vm821 = vmor %vm819, %vm820
        %v822 = vsel %vm821, %v814, %v818
        %v823 = vand.u32 2147483647, %v768
        %vm824 = vcmp.eq.f32.partialorder %v823, 8.507059e+37
        %v825 = vand.u32 %v768, 2147483648
        %v826 = vor.u32 1.1754944e-38, %v825
        %v827 = vsel %vm824, %v826, %v822
        %v828 = vmul.f32 1.0, %v827
        %v829 = vmul.f32 %v749, %v783
        %v830 = vmul.f32 %v750, %v798
        %v831 = vmul.f32 %v751, %v813
        %v832 = vmul.f32 %v752, %v828
        %s833 = scalar_lea.vmem %s2, 16
        %v834 = vld [vmem:[%s833] sm:$0xf]
        %v835 = vld [vmem:[%s833 + $0x4] sm:$0xf]
        %v836 = vpack.c.bf16 %v830, %v829
        %v837 = vpack.c.bf16 %v832, %v831
        %839 = vset.pattern.permute.xlu0 0
        %840 = vperm.xlu0 %839, %v699
        %v841 = vpop.permute.xlu0 %840
        %844 = vset.pattern.permute.xlu0 0
        %845 = vperm.xlu0 %844, %v700
        %v846 = vpop.permute.xlu0 %845
        %v850 = vunpack.c.l.b16 %v834
        %v851 = vunpack.c.l.b16 %v835
        %v852 = vpack.c.b16 %v851, %v850
        %vm853 = vcmask 261120
        %v855 = vsel %vm853, %v852, 0
        %857 = vmatpush.bf16.msra.mxu0 0
        %858 = vmatpush.bf16.msra.mxu0 0
        %859 = vmatpush.bf16.msra.mxu0 0
        %860 = vmatpush.bf16.msra.mxu0 0
        %861 = vmatpush.bf16.msra.mxu0 0
        %862 = vmatpush.bf16.msra.mxu0 0
        %863 = vmatpush.bf16.msra.mxu0 %v837
        %864 = vmatpush.bf16.msra.mxu0 %v836
        %865 = vmatmul.bf16.gmra.mxu0 %v855
        %v866 = vpop.f32.mrf.mxu0
        %v867 = vadd.f32 %v841, %v866
        %v868 = vpop.f32.mrf.mxu0
        %v869 = vadd.f32 %v846, %v868
        %870 = vdwg.mxu0
        %v871 = vxor.u32 %v867, 2147483648
        %v872 = vxor.u32 %v869, 2147483648
        %v873 = vmul.f32 %v871, 1.442695
        %v874 = vpow.pop %v873
        %v875 = vmul.f32 %v872, 1.442695
        %v876 = vpow.pop %v875
        %v877 = vadd.f32 %v874, 1.0
        %v878 = vadd.f32 %v876, 1.0
        %v879 = vrcp.pop %v877
        %v880 = vmul.f32 %v877, %v879
        %v881 = vsub.f32 1.0, %v880
        %v882 = vmul.f32 %v879, %v881
        %v883 = vadd.f32 %v879, %v882
        %vm884 = vweird.f32 %v877
        %vm885 = vweird.f32 %v879
        %vm886 = vmor %vm884, %vm885
        %v887 = vsel %vm886, %v879, %v883
        %v888 = vand.u32 2147483647, %v877
        %vm889 = vcmp.eq.f32.partialorder %v888, 8.507059e+37
        %v890 = vand.u32 %v877, 2147483648
        %v891 = vor.u32 1.1754944e-38, %v890
        %v892 = vsel %vm889, %v891, %v887
        %v893 = vmul.f32 1.0, %v892
        %v894 = vrcp.pop %v878
        %v895 = vmul.f32 %v878, %v894
        %v896 = vsub.f32 1.0, %v895
        %v897 = vmul.f32 %v894, %v896
        %v898 = vadd.f32 %v894, %v897
        %vm899 = vweird.f32 %v878
        %vm900 = vweird.f32 %v894
        %vm901 = vmor %vm899, %vm900
        %v902 = vsel %vm901, %v894, %v898
        %v903 = vand.u32 2147483647, %v878
        %vm904 = vcmp.eq.f32.partialorder %v903, 8.507059e+37
        %v905 = vand.u32 %v878, 2147483648
        %v906 = vor.u32 1.1754944e-38, %v905
        %v907 = vsel %vm904, %v906, %v902
        %v908 = vmul.f32 1.0, %v907
        %v909 = vmul.f32 %v867, %v893
        %v910 = vmul.f32 %v869, %v908
        %911 = vrot.lane.b32.xlu0 %v909, 3
        %v912 = vpop.permute.xlu0 %911
        %913 = vrot.lane.b32.xlu0 %v910, 3
        %v914 = vpop.permute.xlu0 %913
        %vm915 = vcmp.ge.s32.totalorder %v202, 3
        %v916 = vsel %vm915, %v912, 0.0
        %v917 = vsel %vm915, %v914, 0.0
        %v918 = vpack.c.bf16 %v916, %v916
        %v919 = vpack.c.bf16 %v917, %v917
        %920 = vrot.lane.b32.xlu0 %v909, 2
        %v921 = vpop.permute.xlu0 %920
        %922 = vrot.lane.b32.xlu0 %v910, 2
        %v923 = vpop.permute.xlu0 %922
        %v924 = vsel %vm606, %v921, 0.0
        %v925 = vsel %vm606, %v923, 0.0
        %v926 = vpack.c.bf16 %v924, %v924
        %v927 = vpack.c.bf16 %v925, %v925
        %928 = vrot.lane.b32.xlu0 %v909, 1
        %v929 = vpop.permute.xlu0 %928
        %930 = vrot.lane.b32.xlu0 %v910, 1
        %v931 = vpop.permute.xlu0 %930
        %v932 = vsel %vm357, %v929, 0.0
        %v933 = vsel %vm357, %v931, 0.0
        %v934 = vpack.c.bf16 %v932, %v932
        %v935 = vpack.c.bf16 %v933, %v933
        %v936 = vpack.c.bf16 %v909, %v909
        %v937 = vpack.c.bf16 %v910, %v910
        %938 = vrot.lane.b32.xlu0 %v909, 127
        %v939 = vpop.permute.xlu0 %938
        %940 = vrot.lane.b32.xlu0 %v910, 127
        %v941 = vpop.permute.xlu0 %940
        %v942 = vsel %vm368, %v939, 0.0
        %v943 = vsel %vm368, %v941, 0.0
        %v944 = vpack.c.bf16 %v942, %v942
        %v945 = vpack.c.bf16 %v943, %v943
        %946 = vrot.lane.b32.xlu0 %v909, 126
        %v947 = vpop.permute.xlu0 %946
        %948 = vrot.lane.b32.xlu0 %v910, 126
        %v949 = vpop.permute.xlu0 %948
        %v950 = vsel %vm633, %v947, 0.0
        %v951 = vsel %vm633, %v949, 0.0
        %v952 = vpack.c.bf16 %v950, %v950
        %v953 = vpack.c.bf16 %v951, %v951
        %954 = vrot.lane.b32.xlu0 %v909, 125
        %v955 = vpop.permute.xlu0 %954
        %956 = vrot.lane.b32.xlu0 %v910, 125
        %v957 = vpop.permute.xlu0 %956
        %vm958 = vcmp.lt.s32.totalorder %v202, 125
        %v959 = vsel %vm958, %v955, 0.0
        %v960 = vsel %vm958, %v957, 0.0
        %v961 = vpack.c.bf16 %v959, %v959
        %v962 = vpack.c.bf16 %v960, %v960
        %v965 = vunpack.c.l.b16 %v918
        %v966 = vunpack.c.l.b16 %v919
        %v967 = vpack.c.b16 %v966, %v965
        %v971 = vunpack.c.l.b16 %v926
        %v972 = vunpack.c.l.b16 %v927
        %v973 = vpack.c.b16 %v972, %v971
        %v977 = vunpack.c.l.b16 %v934
        %v978 = vunpack.c.l.b16 %v935
        %v979 = vpack.c.b16 %v978, %v977
        %v983 = vunpack.c.l.b16 %v936
        %v984 = vunpack.c.l.b16 %v937
        %v985 = vpack.c.b16 %v984, %v983
        %v989 = vunpack.c.l.b16 %v944
        %v990 = vunpack.c.l.b16 %v945
        %v991 = vpack.c.b16 %v990, %v989
        %v995 = vunpack.c.l.b16 %v952
        %v996 = vunpack.c.l.b16 %v953
        %v997 = vpack.c.b16 %v996, %v995
        %v1001 = vunpack.c.l.b16 %v961
        %v1002 = vunpack.c.l.b16 %v962
        %v1003 = vpack.c.b16 %v1002, %v1001
        %s1005 = scalar_lea.vmem %s3, 8
        %v1006 = vld [vmem:[%s1005] sm:$0xf]
        %vm1007 = vcmask 916480
        %v1009 = vsel %vm1007, %v1006, 0
        %1011 = vmatpush.bf16.msra.mxu0 0
        %1012 = vmatpush.bf16.msra.mxu0 %v1003
        %1013 = vmatpush.bf16.msra.mxu0 %v997
        %1014 = vmatpush.bf16.msra.mxu0 %v991
        %1015 = vmatpush.bf16.msra.mxu0 %v985
        %1016 = vmatpush.bf16.msra.mxu0 %v979
        %1017 = vmatpush.bf16.msra.mxu0 %v973
        %1018 = vmatpush.bf16.msra.mxu0 %v967
        %1019 = vmatmul.bf16.gmra.mxu0 %v1009
        %v1020 = vpop.f32.mrf.mxu0
        %v1021 = vadd.f32 0.0, %v1020
        %v1022 = vpop.f32.mrf.mxu0
        %1023 = vdwg.mxu0
        %1024 = vst [vmem:[%s190 + $0x20] sm:$0xff] %v1021
        %s1025 = sand.u32 %s115, 1
        %s1026 = scalar_lea.sflag [#allocation3], %s1025
        %s1027 = sand.u32 %s115, 1
        %s1028 = smul.addr %s1027, 40
        %s1029 = scalar_lea.vmem [#allocation2], %s1028
        // Predicated region
        $region37: #{dense_block_pallas.1} parent=35 // pred_check
          %p1030 = pneg %p125
        $region38: #{dense_block_pallas.1} parent=35 // pred_check_branch
          %1032 = sbr.rel (%p1030) target = $region40
        $region39: #{dense_block_pallas.1} parent=35 // pred_region
          %1034 = vsyncadd %s1026, 0
          %s1035 = smul.addr %s18, 5
          %s1036 = smul.addr %s1035, 8
          %s1037 = scalar_lea.hbm %s4, %s1036
          %s1038 = sshll.u32 %s1029, 4
          %s1039 = int_to_ptr.vmem [resolvable:$true] %s1038
          %s1040 = sshll.u32 %s1037, 4
          %s1041 = int_to_ptr.hbm [resolvable:$true] %s1040
          %1046 = dma.vmem_to_hbm [thread:$0]  %s1039, 640, %s1041, %s1026, 128, 128, 8
        $region40: #{dense_block_pallas.1} parent=35 // pred_fallthru
          _
      $region36: #{dense_block_pallas.1} parent=5 // pred_fallthru
        _
      %p1047 = scmp.le.s32.totalorder 2, %s13
      // Predicated region
      $region41: #{dense_block_pallas.1} parent=5 // pred_check
        %p1048 = pneg %p1047
      $region42: #{dense_block_pallas.1} parent=5 // pred_check_branch
        %1050 = sbr.rel (%p1048) target = $region44
      $region43: #{dense_block_pallas.1} parent=5 // pred_region
        %s1051 = ssub.s32 %s13, 2
        // Predicated region
        $region45: #{dense_block_pallas.1} parent=43 // pred_check
          %p1052 = pneg %p131
        $region46: #{dense_block_pallas.1} parent=43 // pred_check_branch
          %1054 = sbr.rel (%p1052) target = $region48
        $region47: #{dense_block_pallas.1} parent=43 // pred_region
          %s1055 = sand.u32 %s116, 1
          %s1056 = scalar_lea.sflag [#allocation3], %s1055
          %s1057 = sand.u32 %s116, 1
          %s1058 = smul.addr %s1057, 40
          %s1059 = scalar_lea.vmem [#allocation2], %s1058
          %1061 = dma.done %s1056, 640
        $region48: #{dense_block_pallas.1} parent=43 // pred_fallthru
          _
      $region44: #{dense_block_pallas.1} parent=5 // pred_fallthru
        _
    $region6: #{dense_block_pallas.1} parent=1 // loop_footer
      %s17 = sadd.s32 1, %s13
    $region7: #{dense_block_pallas.1} parent=1 // loop_footer_branch
      %12 = sbr.rel target = $region3
    $region8: #{dense_block_pallas.1} parent=1 // loop_exit
      _
    %1062 = vsyncpa [#allocation3], 1
    %s1063 = scalar_lea.sflag [#allocation3], 1
    %1064 = vsyncpa %s1063, 1

</llo_original>
